<compile_context>
chip_gen: v7x
topology: tpu7x:2x2x1
jax: 0.10.0
libtpu: 0.0.40
codegen_flags: <defaults>
</compile_context>

<pallas_src>
import numpy as np
import jax
import jax.numpy as jnp
from jax import lax
from jax.experimental import pallas as pl
from jax.experimental.pallas import tpu as pltpu

# Fixed Sobel filter, exactly as in Sobelxy.__init__ (convx uses SOBEL,
# convy uses SOBEL.T; same filter broadcast to every channel, groups=channels).
SOBEL = np.array([[1.0, 0.0, -1.0],
                  [2.0, 0.0, -2.0],
                  [1.0, 0.0, -1.0]], dtype=np.float32)


def _sobelxy_kernel(x_ref, o_ref, xp_ref):
    # x_ref : (TC, H, W)        input block (VMEM, auto-pipelined)
    # o_ref : (TC, H, W)        output block
    # xp_ref: (TC, H+2, W+2)    f32 scratch slab with 1-pixel zero halo
    TC, H, W = o_ref.shape

    # Zero only the halo border (interior is fully overwritten every step).
    # Done every grid step so it is correct under megacore grid sharding.
    zrow = jnp.zeros((TC, 1, W + 2), jnp.float32)
    zcol = jnp.zeros((TC, H + 2, 1), jnp.float32)
    xp_ref[:, 0:1, :] = zrow
    xp_ref[:, H + 1:H + 2, :] = zrow
    xp_ref[:, :, 0:1] = zcol
    xp_ref[:, :, W + 1:W + 2] = zcol

    # Interior: the incoming channel block (accumulate in f32; Sobel weights
    # are exact in any float dtype).
    # TODO(synk): optional bf16 compute path on v6e/v7x to halve VMEM/vreg use.
    xp_ref[:, 1:H + 1, 1:W + 1] = x_ref[...].astype(jnp.float32)

    # Separable Sobel.
    # Vertical pass over the full padded width (W+2):
    #   vs[i, c] = xp[i, c] + 2*xp[i+1, c] + xp[i+2, c]   (column smooth)
    #   vd[i, c] = xp[i, c] -             xp[i+2, c]      (column diff)
    top = xp_ref[:, 0:H, :]
    mid = xp_ref[:, 1:H + 1, :]
    bot = xp_ref[:, 2:H + 2, :]
    vs = top + 2.0 * mid + bot          # (TC, H, W+2)
    vd = top - bot                      # (TC, H, W+2)

    # Horizontal pass:
    #   sobelx = vs[:, j-1] - vs[:, j+1]
    #   sobely = vd[:, j-1] + 2*vd[:, j] + vd[:, j+1]
    gx = vs[:, :, 0:W] - vs[:, :, 2:W + 2]
    gy = vd[:, :, 0:W] + 2.0 * vd[:, :, 1:W + 1] + vd[:, :, 2:W + 2]

    o_ref[...] = (jnp.abs(gx) + jnp.abs(gy)).astype(o_ref.dtype)


def _choose_channels_per_block(n_channels, h, w):
    """Pick TC (channels per grid step) dividing n_channels.

    Targets roughly 2 MiB of f32 scratch per block (double-buffered in+out +
    scratch then stays well under scoped VMEM on v5e/v6e/v7x), while keeping
    the grid length >= 2 when possible so v7x megacore can shard it.
    """
    target_bytes = 2 * 1024 * 1024
    per_channel = (h + 2) * (w + 2) * 4
    cap = max(1, target_bytes // per_channel)
    candidates = [d for d in range(1, n_channels + 1)
                  if n_channels % d == 0 and d <= cap]
    multi = [d for d in candidates if n_channels // d >= 2]
    return max(multi) if multi else max(candidates)


def sobelxy(x):
    """x: (B, C, H, W) float array -> (B, C, H, W), |sobelx| + |sobely|."""
    B, C, H, W = x.shape
    N = B * C
    xr = x.reshape(N, H, W)             # free reshape, no data movement

    # TODO(synk): for very large spatial dims (e.g. 4k x 4k on v7x's 64 MiB
    # VMEM) additionally tile H with a 2-row halo; full-H blocks assumed here.
    tc = _choose_channels_per_block(N, H, W)
    grid = (N // tc,)

    out = pl.pallas_call(
        _sobelxy_kernel,
        out_shape=jax.ShapeDtypeStruct((N, H, W), x.dtype),
        grid_spec=pltpu.PrefetchScalarGridSpec(
            num_scalar_prefetch=0,
            grid=grid,
            in_specs=[pl.BlockSpec((tc, H, W), lambda n: (n, 0, 0))],
            out_specs=pl.BlockSpec((tc, H, W), lambda n: (n, 0, 0)),
            scratch_shapes=[pltpu.VMEM((tc, H + 2, W + 2), jnp.float32)],
        ),
        compiler_params=pltpu.CompilerParams(
            dimension_semantics=("parallel",),
            vmem_limit_bytes=32 * 1024 * 1024,
        ),
    )(xr)
    return out.reshape(B, C, H, W)


def _reference(x):
    """Independent reference using lax depthwise conv (PyTorch semantics)."""
    B, C, H, W = x.shape
    wx = jnp.broadcast_to(jnp.asarray(SOBEL)[None, None], (C, 1, 3, 3))
    wy = jnp.broadcast_to(jnp.asarray(SOBEL.T)[None, None], (C, 1, 3, 3))
    dn = lax.conv_dimension_numbers(x.shape, wx.shape, ("NCHW", "OIHW", "NCHW"))
    sx = lax.conv_general_dilated(x, wx, (1, 1), ((1, 1), (1, 1)),
                                  dimension_numbers=dn, feature_group_count=C)
    sy = lax.conv_general_dilated(x, wy, (1, 1), ((1, 1), (1, 1)),
                                  dimension_numbers=dn, feature_group_count=C)
    return jnp.abs(sx) + jnp.abs(sy)


if __name__ == "__main__":
    key = jax.random.PRNGKey(0)
    B, C, H, W = 2, 4, 16, 16
    x = jax.random.normal(key, (B, C, H, W), dtype=jnp.float32)

    y = sobelxy(x)
    jax.block_until_ready(y)

    y_ref = _reference(x)
    np.testing.assert_allclose(np.asarray(y), np.asarray(y_ref),
                               rtol=1e-5, atol=1e-5)
    print("KERNEL_OK")
</pallas_src>

<mosaic_0001>
module attributes {stable_mosaic.version = 11 : i64} {
  func.func @_sobelxy_kernel(%arg0: i32, %arg1: memref<4x16x16xf32, #tpu.memory_space<vmem>>, %arg2: memref<4x16x16xf32, #tpu.memory_space<vmem>>, %arg3: memref<4x18x18xf32, #tpu.memory_space<vmem>>) attributes {dimension_semantics = [#tpu.dimension_semantics<parallel>], iteration_bounds = array<i64: 2>, scalar_prefetch = 0 : i64, scratch_operands = 1 : i64, tpu.core_type = #tpu.core_type<tc>, window_params = [{transform_indices = @transform_0, window_bounds = array<i64: 4, 16, 16>}, {transform_indices = @transform_1, window_bounds = array<i64: 4, 16, 16>}]} {
    %cst = arith.constant 0.000000e+00 : f32
    %0 = vector.broadcast %cst : f32 to vector<4x1x18xf32>
    %cst_0 = arith.constant 0.000000e+00 : f32
    %1 = vector.broadcast %cst_0 : f32 to vector<4x18x1xf32>
    %c0 = arith.constant 0 : index
    %c0_1 = arith.constant 0 : index
    %c0_2 = arith.constant 0 : index
    %2 = vector.load %arg3[%c0, %c0_1, %c0_2] : memref<4x18x18xf32, #tpu.memory_space<vmem>>, vector<4x1x18xf32>
    tpu.vector_store %arg3[%c0, %c0_1, %c0_2], %0 {strides = array<i32>} : memref<4x18x18xf32, #tpu.memory_space<vmem>>, vector<4x1x18xf32>,
    %c0_3 = arith.constant 0 : index
    %c17 = arith.constant 17 : index
    %c0_4 = arith.constant 0 : index
    %3 = vector.load %arg3[%c0_3, %c17, %c0_4] : memref<4x18x18xf32, #tpu.memory_space<vmem>>, vector<4x1x18xf32>
    tpu.vector_store %arg3[%c0_3, %c17, %c0_4], %0 {strides = array<i32>} : memref<4x18x18xf32, #tpu.memory_space<vmem>>, vector<4x1x18xf32>,
    %c0_5 = arith.constant 0 : index
    %c0_6 = arith.constant 0 : index
    %c0_7 = arith.constant 0 : index
    %4 = vector.load %arg3[%c0_5, %c0_6, %c0_7] : memref<4x18x18xf32, #tpu.memory_space<vmem>>, vector<4x18x1xf32>
    tpu.vector_store %arg3[%c0_5, %c0_6, %c0_7], %1 {strides = array<i32>} : memref<4x18x18xf32, #tpu.memory_space<vmem>>, vector<4x18x1xf32>,
    %c0_8 = arith.constant 0 : index
    %c0_9 = arith.constant 0 : index
    %c17_10 = arith.constant 17 : index
    %5 = vector.load %arg3[%c0_8, %c0_9, %c17_10] : memref<4x18x18xf32, #tpu.memory_space<vmem>>, vector<4x18x1xf32>
    tpu.vector_store %arg3[%c0_8, %c0_9, %c17_10], %1 {strides = array<i32>} : memref<4x18x18xf32, #tpu.memory_space<vmem>>, vector<4x18x1xf32>,
    %c0_11 = arith.constant 0 : index
    %c0_12 = arith.constant 0 : index
    %c0_13 = arith.constant 0 : index
    %6 = vector.load %arg1[%c0_11, %c0_12, %c0_13] : memref<4x16x16xf32, #tpu.memory_space<vmem>>, vector<4x16x16xf32>
    %c0_14 = arith.constant 0 : index
    %c1 = arith.constant 1 : index
    %c1_15 = arith.constant 1 : index
    %7 = vector.load %arg3[%c0_14, %c1, %c1_15] : memref<4x18x18xf32, #tpu.memory_space<vmem>>, vector<4x16x16xf32>
    tpu.vector_store %arg3[%c0_14, %c1, %c1_15], %6 {strides = array<i32>} : memref<4x18x18xf32, #tpu.memory_space<vmem>>, vector<4x16x16xf32>,
    %c0_16 = arith.constant 0 : index
    %c0_17 = arith.constant 0 : index
    %c0_18 = arith.constant 0 : index
    %8 = vector.load %arg3[%c0_16, %c0_17, %c0_18] : memref<4x18x18xf32, #tpu.memory_space<vmem>>, vector<4x16x18xf32>
    %c0_19 = arith.constant 0 : index
    %c1_20 = arith.constant 1 : index
    %c0_21 = arith.constant 0 : index
    %9 = vector.load %arg3[%c0_19, %c1_20, %c0_21] : memref<4x18x18xf32, #tpu.memory_space<vmem>>, vector<4x16x18xf32>
    %c0_22 = arith.constant 0 : index
    %c2 = arith.constant 2 : index
    %c0_23 = arith.constant 0 : index
    %10 = vector.load %arg3[%c0_22, %c2, %c0_23] : memref<4x18x18xf32, #tpu.memory_space<vmem>>, vector<4x16x18xf32>
    %cst_24 = arith.constant 2.000000e+00 : f32
    %11 = vector.broadcast %cst_24 : f32 to vector<4x16x18xf32>
    %12 = arith.mulf %11, %9 : vector<4x16x18xf32>
    %13 = arith.addf %8, %12 : vector<4x16x18xf32>
    %14 = arith.addf %13, %10 : vector<4x16x18xf32>
    %15 = arith.subf %8, %10 : vector<4x16x18xf32>
    %16 = vector.extract_strided_slice %14 {offsets = [0, 0, 0], sizes = [4, 16, 16], strides = [1, 1, 1]} : vector<4x16x18xf32> to vector<4x16x16xf32>
    %17 = vector.extract_strided_slice %14 {offsets = [0, 0, 2], sizes = [4, 16, 16], strides = [1, 1, 1]} : vector<4x16x18xf32> to vector<4x16x16xf32>
    %18 = arith.subf %16, %17 : vector<4x16x16xf32>
    %19 = vector.extract_strided_slice %15 {offsets = [0, 0, 0], sizes = [4, 16, 16], strides = [1, 1, 1]} : vector<4x16x18xf32> to vector<4x16x16xf32>
    %20 = vector.extract_strided_slice %15 {offsets = [0, 0, 1], sizes = [4, 16, 16], strides = [1, 1, 1]} : vector<4x16x18xf32> to vector<4x16x16xf32>
    %cst_25 = arith.constant 2.000000e+00 : f32
    %21 = vector.broadcast %cst_25 : f32 to vector<4x16x16xf32>
    %22 = arith.mulf %21, %20 : vector<4x16x16xf32>
    %23 = arith.addf %19, %22 : vector<4x16x16xf32>
    %24 = vector.extract_strided_slice %15 {offsets = [0, 0, 2], sizes = [4, 16, 16], strides = [1, 1, 1]} : vector<4x16x18xf32> to vector<4x16x16xf32>
    %25 = arith.addf %23, %24 : vector<4x16x16xf32>
    %26 = math.absf %18 : vector<4x16x16xf32>
    %27 = math.absf %25 : vector<4x16x16xf32>
    %28 = arith.addf %26, %27 : vector<4x16x16xf32>
    %c0_26 = arith.constant 0 : index
    %c0_27 = arith.constant 0 : index
    %c0_28 = arith.constant 0 : index
    %29 = vector.load %arg2[%c0_26, %c0_27, %c0_28] : memref<4x16x16xf32, #tpu.memory_space<vmem>>, vector<4x16x16xf32>
    tpu.vector_store %arg2[%c0_26, %c0_27, %c0_28], %28 {strides = array<i32>} : memref<4x16x16xf32, #tpu.memory_space<vmem>>, vector<4x16x16xf32>,
    return
  }
  func.func @transform_0(%arg0: i32) -> (i32, i32, i32) {
    %c0_i32 = arith.constant 0 : i32
    %c0_i32_0 = arith.constant 0 : i32
    %c0_i32_1 = arith.constant 0 : i32
    return %arg0, %c0_i32, %c0_i32_0 : i32, i32, i32
  }
  func.func @transform_1(%arg0: i32) -> (i32, i32, i32) {
    %c0_i32 = arith.constant 0 : i32
    %c0_i32_0 = arith.constant 0 : i32
    %c0_i32_1 = arith.constant 0 : i32
    return %arg0, %c0_i32, %c0_i32_0 : i32, i32, i32
  }
}

</mosaic_0001>

<llo_original>
// kernel: tpu_custom_call.1
$region0: #{tpu_custom_call.1}
  #allocation0 [shape = 'u32[]', space=smem, size = 0x4, offset = 0x4, fixed_abs, tag = 'smem constant byte address 0x4 - core index']
  #allocation1 [shape = 'u32[144,128]{1,0:T(1,128)}', space=vmem, size = 0x12000, scoped, tag = 'internal scratch']
  #allocation2 [shape = 'f32[4,18,18]{2,1,0:T(8,128)}', space=vmem, size = 0xc000, scoped, tag = 'scratch operand']
  %s0 = inlined_call_operand.hbm [shape: f32[8,16,16], index: 0, kind: input, shape index: {}]
  %s1 = inlined_call_operand.hbm [shape: f32[8,16,16], index: 1, kind: output, shape index: {}]
  %s2 = sld [smem:[#allocation0]]
  $region41: #{tpu_custom_call.1} parent=0
    _
  %s4 = ssub.s32 1, %s2
  %s5 = scalar_select 0, %s4, %s2
  $region1: #{tpu_custom_call.1} parent=0
    #allocation3 [shape = 'u8[65536]{0}', space=vmem, size = 0x10000, scoped, tag = 'input window, operand 0']
    #allocation4 [shape = 's32[2]{0}', space=sflag, size = 0x8, scoped, tag = 'scoped memory for tpu_custom_call.1']
    #allocation5 [shape = 's32[2]{0}', space=sflag, size = 0x8, scoped, tag = 'scoped memory for tpu_custom_call.1']
    #allocation6 [shape = 'u8[65536]{0}', space=vmem, size = 0x10000, scoped, tag = 'output window, operand 0']
    %6 = vsyncpa [#allocation4], 0
    %s7 = scalar_lea.sflag [#allocation4], 1
    %8 = vsyncpa %s7, 0
    %9 = vsyncpa [#allocation5], 0
    %s10 = scalar_lea.sflag [#allocation5], 1
    %11 = vsyncpa %s10, 0
    loop: start=0, step=1, limit=4
    $region2: #{tpu_custom_call.1} parent=1 // loop_pre_header
      _
    $region3: #{tpu_custom_call.1} parent=1 // loop_header
      %s13 = sphi 0, %s17
      %p14 = scmp.ge.s32.totalorder %s13, 4
      %s23 = sphi 0, %s25
      %s26 = sphi 0, %s23
      %s27 = sphi 0, %s26
      %s43 = sphi 0, %s27
      %s49 = sphi 0, %s51
      %s52 = sphi 0, %s49
      %s53 = sphi 0, %s52
      %s69 = sphi 0, %s53
    $region4: #{tpu_custom_call.1} parent=1 // loop_header_branch
      %16 = sbr.rel (%p14) target = $region8
    $region5: #{tpu_custom_call.1} parent=1 // loop_body
      %s18 = ssub.s32 %s13, 1
      %s19 = ssub.s32 %s13, 2
      %s20 = sadd.s32 %s13, 1
      %s21 = ssub.s32 %s13, %s20
      %p22 = scmp.eq.s32.totalorder %s21, 0
      %s24 = sadd.s32 %s23, 1
      %s25 = scalar_select %p22, %s23, %s24
      %p28 = pneg %p22
      %p29 = scmp.eq.s32.totalorder %s13, 1
      %p30 = por %p28, %p29
      %p31 = scmp.ne.s32.totalorder %s23, %s26
      %p32 = scmp.eq.s32.totalorder %s13, 0
      %p33 = por %p31, %p32
      %p34 = scmp.ne.s32.totalorder %s23, %s26
      %p35 = scmp.eq.s32.totalorder %s18, 1
      %p36 = por %p34, %p35
      %p37 = scmp.ne.s32.totalorder %s26, %s27
      %p38 = scmp.eq.s32.totalorder %s18, 0
      %p39 = por %p37, %p38
      %p40 = scmp.ne.s32.totalorder %s26, %s27
      %p41 = scmp.eq.s32.totalorder %s19, 1
      %p42 = por %p40, %p41
      %p44 = scmp.ne.s32.totalorder %s27, %s43
      %p45 = scmp.eq.s32.totalorder %s19, 0
      %p46 = por %p44, %p45
      %s47 = ssub.s32 %s13, %s20
      %p48 = scmp.eq.s32.totalorder %s47, 0
      %s50 = sadd.s32 %s49, 1
      %s51 = scalar_select %p48, %s49, %s50
      %p54 = pneg %p48
      %p55 = scmp.eq.s32.totalorder %s13, 1
      %p56 = por %p54, %p55
      %p57 = scmp.ne.s32.totalorder %s49, %s52
      %p58 = scmp.eq.s32.totalorder %s13, 0
      %p59 = por %p57, %p58
      %p60 = scmp.ne.s32.totalorder %s49, %s52
      %p61 = scmp.eq.s32.totalorder %s18, 1
      %p62 = por %p60, %p61
      %p63 = scmp.ne.s32.totalorder %s52, %s53
      %p64 = scmp.eq.s32.totalorder %s18, 0
      %p65 = por %p63, %p64
      %p66 = scmp.ne.s32.totalorder %s52, %s53
      %p67 = scmp.eq.s32.totalorder %s19, 1
      %p68 = por %p66, %p67
      %p70 = scmp.ne.s32.totalorder %s53, %s69
      %p71 = scmp.eq.s32.totalorder %s19, 0
      %p72 = por %p70, %p71
      %p73 = scmp.le.s32.totalorder 1, %s13
      %p74 = scmp.lt.s32.totalorder %s13, 3
      %p75 = pnand %p73, %p74
      %p76 = pneg %p75
      // Predicated region
      $region9: #{tpu_custom_call.1} parent=5 // pred_check
        _
      $region10: #{tpu_custom_call.1} parent=5 // pred_check_branch
        %78 = sbr.rel (%p75) target = $region12
      $region11: #{tpu_custom_call.1} parent=5 // pred_region
        %s79 = ssub.s32 %s13, 1
      $region12: #{tpu_custom_call.1} parent=5 // pred_fallthru
        _
      %p80 = scmp.lt.s32.totalorder %s13, 2
      // Predicated region
      $region13: #{tpu_custom_call.1} parent=5 // pred_check
        %p81 = pneg %p80
      $region14: #{tpu_custom_call.1} parent=5 // pred_check_branch
        %83 = sbr.rel (%p81) target = $region16
      $region15: #{tpu_custom_call.1} parent=5 // pred_region
        // Predicated region
        $region17: #{tpu_custom_call.1} parent=15 // pred_check
          %p84 = pneg %p33
        $region18: #{tpu_custom_call.1} parent=15 // pred_check_branch
          %86 = sbr.rel (%p84) target = $region20
        $region19: #{tpu_custom_call.1} parent=15 // pred_region
          %s87 = sand.u32 %s23, 1
          %s88 = scalar_lea.sflag [#allocation4], %s87
          %s89 = sand.u32 %s23, 1
          %s90 = smul.addr %s89, 64
          %s91 = scalar_lea.vmem [#allocation3], %s90
          %s92 = smul.u32 4, %s13
          %s94 = ssub.s32 1024, 1024
          %95 = vsyncadd %s88, %s94
          %s96 = smul.addr %s92, 2
          %s97 = smul.addr %s96, 128
          %s98 = scalar_lea.hbm %s0, %s97
          %s99 = sshll.u32 %s91, 4
          %s100 = int_to_ptr.vmem [resolvable:$true] %s99
          %105 = dma.hbm_to_vmem [thread:$0]  %s98, 1024, %s100, %s88, 128, 128, 8
        $region20: #{tpu_custom_call.1} parent=15 // pred_fallthru
          _
      $region16: #{tpu_custom_call.1} parent=5 // pred_fallthru
        _
      %p106 = scmp.le.s32.totalorder 1, %s13
      %p107 = scmp.lt.s32.totalorder %s13, 3
      %p108 = pnand %p106, %p107
      %p109 = pneg %p108
      // Predicated region
      $region21: #{tpu_custom_call.1} parent=5 // pred_check
        _
      $region22: #{tpu_custom_call.1} parent=5 // pred_check_branch
        %111 = sbr.rel (%p108) target = $region24
      $region23: #{tpu_custom_call.1} parent=5 // pred_region
        %s112 = ssub.s32 %s13, 1
        %s113 = sand.u32 %s26, 1
        %s114 = scalar_lea.sflag [#allocation4], %s113
        %s115 = sand.u32 %s26, 1
        %s116 = smul.addr %s115, 64
        %s117 = scalar_lea.vmem [#allocation3], %s116
        // Predicated region
        $region25: #{tpu_custom_call.1} parent=23 // pred_check
          %p118 = pneg %p39
        $region26: #{tpu_custom_call.1} parent=23 // pred_check_branch
          %120 = sbr.rel (%p118) target = $region28
        $region27: #{tpu_custom_call.1} parent=23 // pred_region
          %121 = dma.done %s114, 1024
        $region28: #{tpu_custom_call.1} parent=23 // pred_fallthru
          _
        %s122 = sand.u32 %s26, 1
        %s123 = scalar_lea.sflag [#allocation4], %s122
        %s124 = sand.u32 %s26, 1
        %s125 = smul.addr %s124, 64
        %s126 = scalar_lea.vmem [#allocation3], %s125
        %p127 = pneg %p39
        %p128 = pneg %p36
        %p129 = pneg %p65
        %p130 = pneg %p62
        %s131 = sand.u32 %s52, 1
        %s132 = scalar_lea.sflag [#allocation5], %s131
        %s133 = sand.u32 %s52, 1
        %s134 = smul.addr %s133, 64
        %s135 = scalar_lea.vmem [#allocation6], %s134
        %s136 = smul.u32 4, %s18
        %s137 = smul.u32 4, %s18
        %vm138 = vcmask 139264
        %139 = vst.msk [vmem:[#allocation2] sm:$0x1] %vm138, 0.0
        %140 = vst.msk [vmem:[#allocation2 + $0x18] sm:$0x1] %vm138, 0.0
        %141 = vst.msk [vmem:[#allocation2 + $0x30] sm:$0x1] %vm138, 0.0
        %142 = vst.msk [vmem:[#allocation2 + $0x48] sm:$0x1] %vm138, 0.0
        %143 = vst.msk [vmem:[#allocation2 + $0x11] sm:$0x1] %vm138, 0.0
        %144 = vst.msk [vmem:[#allocation2 + $0x29] sm:$0x1] %vm138, 0.0
        %145 = vst.msk [vmem:[#allocation2 + $0x41] sm:$0x1] %vm138, 0.0
        %146 = vst.msk [vmem:[#allocation2 + $0x59] sm:$0x1] %vm138, 0.0
        %vm147 = vcmask 7168
        %148 = vst.msk [vmem:[#allocation2] sm:$0xff] %vm147, 0.0
        %149 = vst.msk [vmem:[#allocation2 + $0x8] sm:$0xff] %vm147, 0.0
        %vm150 = vcmask 1024
        %151 = vst.msk [vmem:[#allocation2 + $0x10] sm:$0x3] %vm150, 0.0
        %152 = vst.msk [vmem:[#allocation2 + $0x18] sm:$0xff] %vm147, 0.0
        %153 = vst.msk [vmem:[#allocation2 + $0x20] sm:$0xff] %vm147, 0.0
        %154 = vst.msk [vmem:[#allocation2 + $0x28] sm:$0x3] %vm150, 0.0
        %155 = vst.msk [vmem:[#allocation2 + $0x30] sm:$0xff] %vm147, 0.0
        %156 = vst.msk [vmem:[#allocation2 + $0x38] sm:$0xff] %vm147, 0.0
        %157 = vst.msk [vmem:[#allocation2 + $0x40] sm:$0x3] %vm150, 0.0
        %158 = vst.msk [vmem:[#allocation2 + $0x48] sm:$0xff] %vm147, 0.0
        %159 = vst.msk [vmem:[#allocation2 + $0x50] sm:$0xff] %vm147, 0.0
        %160 = vst.msk [vmem:[#allocation2 + $0x58] sm:$0x3] %vm150, 0.0
        %vm161 = vcmask 146568
        %162 = vst.msk [vmem:[#allocation2] sm:$0xff] %vm161, 0.0
        %163 = vst.msk [vmem:[#allocation2 + $0x8] sm:$0xff] %vm161, 0.0
        %vm164 = vcmask 140424
        %165 = vst.msk [vmem:[#allocation2 + $0x10] sm:$0x3] %vm164, 0.0
        %166 = vst.msk [vmem:[#allocation2 + $0x18] sm:$0xff] %vm161, 0.0
        %167 = vst.msk [vmem:[#allocation2 + $0x20] sm:$0xff] %vm161, 0.0
        %168 = vst.msk [vmem:[#allocation2 + $0x28] sm:$0x3] %vm164, 0.0
        %169 = vst.msk [vmem:[#allocation2 + $0x30] sm:$0xff] %vm161, 0.0
        %170 = vst.msk [vmem:[#allocation2 + $0x38] sm:$0xff] %vm161, 0.0
        %171 = vst.msk [vmem:[#allocation2 + $0x40] sm:$0x3] %vm164, 0.0
        %172 = vst.msk [vmem:[#allocation2 + $0x48] sm:$0xff] %vm161, 0.0
        %173 = vst.msk [vmem:[#allocation2 + $0x50] sm:$0xff] %vm161, 0.0
        %174 = vst.msk [vmem:[#allocation2 + $0x58] sm:$0x3] %vm164, 0.0
        %v175 = vld [vmem:[%s117] sm:$0xff]
        %v176 = vld [vmem:[%s117 + $0x8] sm:$0xff]
        %v177 = vld [vmem:[%s117 + $0x10] sm:$0xff]
        %v178 = vld [vmem:[%s117 + $0x18] sm:$0xff]
        %v179 = vld [vmem:[%s117 + $0x20] sm:$0xff]
        %v180 = vld [vmem:[%s117 + $0x28] sm:$0xff]
        %v181 = vld [vmem:[%s117 + $0x30] sm:$0xff]
        %v182 = vld [vmem:[%s117 + $0x38] sm:$0xff]
        %191 = vrot.lane.b32.xlu0 %v175, 1
        %v192 = vpop.permute.xlu0 %191
        %193 = vrot.lane.b32.xlu0 %v176, 1
        %v194 = vpop.permute.xlu0 %193
        %195 = vrot.lane.b32.xlu0 %v177, 1
        %v196 = vpop.permute.xlu0 %195
        %197 = vrot.lane.b32.xlu0 %v178, 1
        %v198 = vpop.permute.xlu0 %197
        %199 = vrot.lane.b32.xlu0 %v179, 1
        %v200 = vpop.permute.xlu0 %199
        %201 = vrot.lane.b32.xlu0 %v180, 1
        %v202 = vpop.permute.xlu0 %201
        %203 = vrot.lane.b32.xlu0 %v181, 1
        %v204 = vpop.permute.xlu0 %203
        %205 = vrot.lane.b32.xlu0 %v182, 1
        %v206 = vpop.permute.xlu0 %205
        %vm215 = vcmask 138248
        %216 = vst.msk [vmem:[#allocation2 + $0x1] sm:$0xff] %vm215, %v192
        %217 = vst.msk [vmem:[#allocation2 + $0x9] sm:$0xff] %vm215, %v194
        %218 = vst.msk [vmem:[#allocation2 + $0x19] sm:$0xff] %vm215, %v196
        %219 = vst.msk [vmem:[#allocation2 + $0x21] sm:$0xff] %vm215, %v198
        %220 = vst.msk [vmem:[#allocation2 + $0x31] sm:$0xff] %vm215, %v200
        %221 = vst.msk [vmem:[#allocation2 + $0x39] sm:$0xff] %vm215, %v202
        %222 = vst.msk [vmem:[#allocation2 + $0x49] sm:$0xff] %vm215, %v204
        %223 = vst.msk [vmem:[#allocation2 + $0x51] sm:$0xff] %vm215, %v206
        %v224 = vld [vmem:[#allocation2] sm:$0xff]
        %v225 = vld [vmem:[#allocation2 + $0x8] sm:$0xff]
        %v226 = vld [vmem:[#allocation2 + $0x18] sm:$0xff]
        %v227 = vld [vmem:[#allocation2 + $0x20] sm:$0xff]
        %v228 = vld [vmem:[#allocation2 + $0x30] sm:$0xff]
        %v229 = vld [vmem:[#allocation2 + $0x38] sm:$0xff]
        %v230 = vld [vmem:[#allocation2 + $0x48] sm:$0xff]
        %v231 = vld [vmem:[#allocation2 + $0x50] sm:$0xff]
        %v232 = vld [vmem:[#allocation2 + $0x1] sm:$0xff]
        %v233 = vld [vmem:[#allocation2 + $0x9] sm:$0xff]
        %v234 = vld [vmem:[#allocation2 + $0x19] sm:$0xff]
        %v235 = vld [vmem:[#allocation2 + $0x21] sm:$0xff]
        %v236 = vld [vmem:[#allocation2 + $0x31] sm:$0xff]
        %v237 = vld [vmem:[#allocation2 + $0x39] sm:$0xff]
        %v238 = vld [vmem:[#allocation2 + $0x49] sm:$0xff]
        %v239 = vld [vmem:[#allocation2 + $0x51] sm:$0xff]
        %v240 = vld [vmem:[#allocation2 + $0x2] sm:$0xff]
        %v241 = vld [vmem:[#allocation2 + $0xa] sm:$0xff]
        %v242 = vld [vmem:[#allocation2 + $0x1a] sm:$0xff]
        %v243 = vld [vmem:[#allocation2 + $0x22] sm:$0xff]
        %v244 = vld [vmem:[#allocation2 + $0x32] sm:$0xff]
        %v245 = vld [vmem:[#allocation2 + $0x3a] sm:$0xff]
        %v246 = vld [vmem:[#allocation2 + $0x4a] sm:$0xff]
        %v247 = vld [vmem:[#allocation2 + $0x52] sm:$0xff]
        %v248 = vmul.f32 %v232, 2.0
        %v249 = vmul.f32 %v233, 2.0
        %v250 = vmul.f32 %v234, 2.0
        %v251 = vmul.f32 %v235, 2.0
        %v252 = vmul.f32 %v236, 2.0
        %v253 = vmul.f32 %v237, 2.0
        %v254 = vmul.f32 %v238, 2.0
        %v255 = vmul.f32 %v239, 2.0
        %v256 = vadd.f32 %v224, %v248
        %v257 = vadd.f32 %v225, %v249
        %v258 = vadd.f32 %v226, %v250
        %v259 = vadd.f32 %v227, %v251
        %v260 = vadd.f32 %v228, %v252
        %v261 = vadd.f32 %v229, %v253
        %v262 = vadd.f32 %v230, %v254
        %v263 = vadd.f32 %v231, %v255
        %v264 = vadd.f32 %v256, %v240
        %v265 = vadd.f32 %v257, %v241
        %v266 = vadd.f32 %v258, %v242
        %v267 = vadd.f32 %v259, %v243
        %v268 = vadd.f32 %v260, %v244
        %v269 = vadd.f32 %v261, %v245
        %v270 = vadd.f32 %v262, %v246
        %v271 = vadd.f32 %v263, %v247
        %v272 = vsub.f32 %v224, %v240
        %v273 = vsub.f32 %v225, %v241
        %v274 = vsub.f32 %v226, %v242
        %v275 = vsub.f32 %v227, %v243
        %v276 = vsub.f32 %v228, %v244
        %v277 = vsub.f32 %v229, %v245
        %v278 = vsub.f32 %v230, %v246
        %v279 = vsub.f32 %v231, %v247
        %288 = vrot.lane.b32.xlu0 %v264, 126
        %v289 = vpop.permute.xlu0 %288
        %290 = vrot.lane.b32.xlu0 %v265, 126
        %v291 = vpop.permute.xlu0 %290
        %292 = vrot.lane.b32.xlu0 %v266, 126
        %v293 = vpop.permute.xlu0 %292
        %294 = vrot.lane.b32.xlu0 %v267, 126
        %v295 = vpop.permute.xlu0 %294
        %296 = vrot.lane.b32.xlu0 %v268, 126
        %v297 = vpop.permute.xlu0 %296
        %298 = vrot.lane.b32.xlu0 %v269, 126
        %v299 = vpop.permute.xlu0 %298
        %300 = vrot.lane.b32.xlu0 %v270, 126
        %v301 = vpop.permute.xlu0 %300
        %302 = vrot.lane.b32.xlu0 %v271, 126
        %v303 = vpop.permute.xlu0 %302
        %v312 = vsub.f32 %v264, %v289
        %v313 = vsub.f32 %v265, %v291
        %v314 = vsub.f32 %v266, %v293
        %v315 = vsub.f32 %v267, %v295
        %v316 = vsub.f32 %v268, %v297
        %v317 = vsub.f32 %v269, %v299
        %v318 = vsub.f32 %v270, %v301
        %v319 = vsub.f32 %v271, %v303
        %v320 = vmul.f32 %v272, 2.0
        %v321 = vmul.f32 %v273, 2.0
        %v322 = vmul.f32 %v274, 2.0
        %v323 = vmul.f32 %v275, 2.0
        %v324 = vmul.f32 %v276, 2.0
        %v325 = vmul.f32 %v277, 2.0
        %v326 = vmul.f32 %v278, 2.0
        %v327 = vmul.f32 %v279, 2.0
        %336 = vrot.lane.b32.xlu0 %v320, 127
        %v337 = vpop.permute.xlu0 %336
        %338 = vrot.lane.b32.xlu0 %v321, 127
        %v339 = vpop.permute.xlu0 %338
        %340 = vrot.lane.b32.xlu0 %v322, 127
        %v341 = vpop.permute.xlu0 %340
        %342 = vrot.lane.b32.xlu0 %v323, 127
        %v343 = vpop.permute.xlu0 %342
        %344 = vrot.lane.b32.xlu0 %v324, 127
        %v345 = vpop.permute.xlu0 %344
        %346 = vrot.lane.b32.xlu0 %v325, 127
        %v347 = vpop.permute.xlu0 %346
        %348 = vrot.lane.b32.xlu0 %v326, 127
        %v349 = vpop.permute.xlu0 %348
        %350 = vrot.lane.b32.xlu0 %v327, 127
        %v351 = vpop.permute.xlu0 %350
        %v360 = vadd.f32 %v272, %v337
        %v361 = vadd.f32 %v273, %v339
        %v362 = vadd.f32 %v274, %v341
        %v363 = vadd.f32 %v275, %v343
        %v364 = vadd.f32 %v276, %v345
        %v365 = vadd.f32 %v277, %v347
        %v366 = vadd.f32 %v278, %v349
        %v367 = vadd.f32 %v279, %v351
        %376 = vrot.lane.b32.xlu0 %v272, 126
        %v377 = vpop.permute.xlu0 %376
        %378 = vrot.lane.b32.xlu0 %v273, 126
        %v379 = vpop.permute.xlu0 %378
        %380 = vrot.lane.b32.xlu0 %v274, 126
        %v381 = vpop.permute.xlu0 %380
        %382 = vrot.lane.b32.xlu0 %v275, 126
        %v383 = vpop.permute.xlu0 %382
        %384 = vrot.lane.b32.xlu0 %v276, 126
        %v385 = vpop.permute.xlu0 %384
        %386 = vrot.lane.b32.xlu0 %v277, 126
        %v387 = vpop.permute.xlu0 %386
        %388 = vrot.lane.b32.xlu0 %v278, 126
        %v389 = vpop.permute.xlu0 %388
        %390 = vrot.lane.b32.xlu0 %v279, 126
        %v391 = vpop.permute.xlu0 %390
        %v400 = vadd.f32 %v360, %v377
        %v401 = vadd.f32 %v361, %v379
        %v402 = vadd.f32 %v362, %v381
        %v403 = vadd.f32 %v363, %v383
        %v404 = vadd.f32 %v364, %v385
        %v405 = vadd.f32 %v365, %v387
        %v406 = vadd.f32 %v366, %v389
        %v407 = vadd.f32 %v367, %v391
        %v408 = vand.u32 2147483647, %v312
        %v409 = vand.u32 2147483647, %v313
        %v410 = vand.u32 2147483647, %v314
        %v411 = vand.u32 2147483647, %v315
        %v412 = vand.u32 2147483647, %v316
        %v413 = vand.u32 2147483647, %v317
        %v414 = vand.u32 2147483647, %v318
        %v415 = vand.u32 2147483647, %v319
        %v416 = vand.u32 2147483647, %v400
        %v417 = vand.u32 2147483647, %v401
        %v418 = vand.u32 2147483647, %v402
        %v419 = vand.u32 2147483647, %v403
        %v420 = vand.u32 2147483647, %v404
        %v421 = vand.u32 2147483647, %v405
        %v422 = vand.u32 2147483647, %v406
        %v423 = vand.u32 2147483647, %v407
        %v424 = vadd.f32 %v408, %v416
        %v425 = vadd.f32 %v409, %v417
        %v426 = vadd.f32 %v410, %v418
        %v427 = vadd.f32 %v411, %v419
        %v428 = vadd.f32 %v412, %v420
        %v429 = vadd.f32 %v413, %v421
        %v430 = vadd.f32 %v414, %v422
        %v431 = vadd.f32 %v415, %v423
        %vm432 = vcmask 130048
        %433 = vst.msk [vmem:[%s135] sm:$0xff] %vm432, %v424
        %434 = vst.msk [vmem:[%s135 + $0x8] sm:$0xff] %vm432, %v425
        %435 = vst.msk [vmem:[%s135 + $0x10] sm:$0xff] %vm432, %v426
        %436 = vst.msk [vmem:[%s135 + $0x18] sm:$0xff] %vm432, %v427
        %437 = vst.msk [vmem:[%s135 + $0x20] sm:$0xff] %vm432, %v428
        %438 = vst.msk [vmem:[%s135 + $0x28] sm:$0xff] %vm432, %v429
        %439 = vst.msk [vmem:[%s135 + $0x30] sm:$0xff] %vm432, %v430
        %440 = vst.msk [vmem:[%s135 + $0x38] sm:$0xff] %vm432, %v431
        %s441 = sand.u32 %s52, 1
        %s442 = scalar_lea.sflag [#allocation5], %s441
        %s443 = sand.u32 %s52, 1
        %s444 = smul.addr %s443, 64
        %s445 = scalar_lea.vmem [#allocation6], %s444
        // Predicated region
        $region29: #{tpu_custom_call.1} parent=23 // pred_check
          %p446 = pneg %p62
        $region30: #{tpu_custom_call.1} parent=23 // pred_check_branch
          %448 = sbr.rel (%p446) target = $region32
        $region31: #{tpu_custom_call.1} parent=23 // pred_region
          %s449 = smul.u32 4, %s18
          %s451 = ssub.s32 1024, 1024
          %452 = vsyncadd %s442, %s451
          %s453 = smul.addr %s449, 2
          %s454 = smul.addr %s453, 128
          %s455 = scalar_lea.hbm %s1, %s454
          %s456 = sshll.u32 %s445, 4
          %s457 = int_to_ptr.vmem [resolvable:$true] %s456
          %462 = dma.vmem_to_hbm [thread:$0]  %s457, 1024, %s455, %s442, 128, 128, 8
        $region32: #{tpu_custom_call.1} parent=23 // pred_fallthru
          _
      $region24: #{tpu_custom_call.1} parent=5 // pred_fallthru
        _
      %p463 = scmp.le.s32.totalorder 2, %s13
      // Predicated region
      $region33: #{tpu_custom_call.1} parent=5 // pred_check
        %p464 = pneg %p463
      $region34: #{tpu_custom_call.1} parent=5 // pred_check_branch
        %466 = sbr.rel (%p464) target = $region36
      $region35: #{tpu_custom_call.1} parent=5 // pred_region
        %s467 = ssub.s32 %s13, 2
        // Predicated region
        $region37: #{tpu_custom_call.1} parent=35 // pred_check
          %p468 = pneg %p68
        $region38: #{tpu_custom_call.1} parent=35 // pred_check_branch
          %470 = sbr.rel (%p468) target = $region40
        $region39: #{tpu_custom_call.1} parent=35 // pred_region
          %s471 = sand.u32 %s53, 1
          %s472 = scalar_lea.sflag [#allocation5], %s471
          %s473 = sand.u32 %s53, 1
          %s474 = smul.addr %s473, 64
          %s475 = scalar_lea.vmem [#allocation6], %s474
          %476 = dma.done %s472, 1024
        $region40: #{tpu_custom_call.1} parent=35 // pred_fallthru
          _
      $region36: #{tpu_custom_call.1} parent=5 // pred_fallthru
        _
    $region6: #{tpu_custom_call.1} parent=1 // loop_footer
      %s17 = sadd.s32 1, %s13
    $region7: #{tpu_custom_call.1} parent=1 // loop_footer_branch
      %12 = sbr.rel target = $region3
    $region8: #{tpu_custom_call.1} parent=1 // loop_exit
      _
    %477 = vsyncpa [#allocation4], 1
    %s478 = scalar_lea.sflag [#allocation4], 1
    %479 = vsyncpa %s478, 1
    %480 = vsyncpa [#allocation5], 1
    %s481 = scalar_lea.sflag [#allocation5], 1
    %482 = vsyncpa %s481, 1

</llo_original>
